<compile_context>
chip_gen: v7x
topology: tpu7x:2x2x1
jax: 0.10.0
libtpu: 0.0.40
codegen_flags: <defaults>
</compile_context>

<pallas_src>
import functools
import math

import jax
import jax.numpy as jnp
from jax.experimental import pallas as pl
from jax.experimental.pallas import tpu as pltpu

# Loss hyper-parameters (match the PyTorch module defaults).
DICE_W = 0.4
FOCAL_W = 0.4
BCE_W = 0.2
ALPHA = 0.5
BETA = 0.7
SMOOTH = 1e-6

LANE = 128
SUBLANE = 8


def _vmem_limit_bytes():
    """Generation-aware VMEM limit (v5e/v6e: 128 MiB physical, v7x: 64 MiB)."""
    try:
        cap = int(pltpu.get_tpu_info().vmem_capacity_bytes)
    except Exception:
        cap = None
    if cap is None:
        return 32 * 1024 * 1024
    if cap >= 96 * 1024 * 1024:
        return 64 * 1024 * 1024            # v5e / v6e: plenty of headroom
    return min(40 * 1024 * 1024, max(cap // 2, 8 * 1024 * 1024))   # v7x-style


def _choose_tile_rows(batch, rows, itemsize, pack, max_tile_rows, vmem_limit):
    """Row-tile size: multiple of the dtype's packed-sublane count, VMEM-budgeted."""
    # Bytes resident per row of 128 lanes:
    #   2 inputs x 2 pipeline buffers (native dtype) + ~6 live f32 full-tile
    #   temporaries (x, t, probs, sig_abs, bce_elem, probs*t).
    per_row = batch * LANE * (2 * 2 * itemsize + 6 * 4)
    budget = int(0.85 * vmem_limit) - (2 << 20)   # headroom: acc / selector / out
    cap = max(pack, min(budget // per_row, max_tile_rows))
    cap = (cap // pack) * pack
    rows_cap = ((rows + pack - 1) // pack) * pack
    tile_r = max(pack, min(cap, rows_cap))
    n_tiles = pl.cdiv(rows, tile_r)
    return tile_r, n_tiles


def _partial_sums_kernel(x_ref, t_ref, out_ref, acc_ref, *,
                         b, b_pad, tile_r, rows, n_tiles, tiles_per_core,
                         ragged, has_dup_steps):
    p = pl.program_id(0)                  # core split
    r = pl.program_id(1)                  # row-tile step within the split
    tile_idx = p * tiles_per_core + r

    @pl.when(r == 0)
    def _init():
        acc_ref[...] = jnp.zeros_like(acc_ref)

    # (b, tile_r, 128) blocks, cast to f32 in-kernel (inputs stream native dtype).
    x = x_ref[...].astype(jnp.float32)
    t = t_ref[...].astype(jnp.float32)

    if ragged:
        # Rows past the true row count come from a partially-OOB DMA (garbage):
        # force logits -> -100 (sigmoid == 0, bce == 0) and targets -> 0.
        row_id = tile_idx * tile_r + jax.lax.broadcasted_iota(
            jnp.int32, (1, tile_r, 1), 1)
        valid = row_id < rows
        x = jnp.where(valid, x, -100.0)
        t = jnp.where(valid, t, 0.0)

    # Sigmoid with a single EUP transcendental: sigmoid(x) = 0.5*tanh(x/2) + 0.5.
    probs = 0.5 * jnp.tanh(0.5 * x) + 0.5
    # BCE-with-logits reusing the sigmoid:
    #   log1p(exp(-|x|)) == -log(sigmoid(|x|)) == -log(where(x >= 0, p, 1 - p)).
    sig_abs = jnp.where(x >= 0.0, probs, 1.0 - probs)
    bce_elem = jnp.maximum(x, 0.0) - x * t - jnp.log(sig_abs)

    # Row reductions offloaded to the (otherwise idle) MXU: a 0/1 selector picks
    # each sample's rows out of the flattened (b*tile_r, 128) tile, keeping the
    # steady-state VPU work to the elementwise ops above.
    col = jax.lax.broadcasted_iota(jnp.int32, (b_pad, b * tile_r), 1)
    row = jax.lax.broadcasted_iota(jnp.int32, (b_pad, b * tile_r), 0)
    sel = jnp.logical_and(col >= row * tile_r,
                          col < (row + 1) * tile_r).astype(jnp.float32)

    def rowsum(v):                        # (b, tile_r, 128) -> (b_pad, 128)
        return jnp.dot(sel, v.reshape(b * tile_r, LANE),
                       preferred_element_type=jnp.float32)

    tp_part = rowsum(probs * t)
    sp_part = rowsum(probs)
    st_part = rowsum(t)
    bce_part = rowsum(bce_elem)

    def _accumulate():
        acc_ref[0] += tp_part
        acc_ref[1] += sp_part
        acc_ref[2] += st_part
        acc_ref[3] += bce_part

    if has_dup_steps:
        # The grid over-covers by < n_splits steps; those re-read a valid
        # (clamped) tile and are simply not accumulated.
        pl.when(tile_idx < n_tiles)(_accumulate)
    else:
        _accumulate()

    @pl.when(r == tiles_per_core - 1)
    def _store():
        out_ref[0] = acc_ref[...]


def dice_focal_loss(logits, targets, *, max_tile_rows=1024, num_core_splits=2):
    """logits, targets: (B, ...) arrays (any float dtype). Returns an f32 scalar."""
    batch = logits.shape[0]
    n_elems = int(math.prod(logits.shape[1:]))

    itemsize = max(jnp.dtype(logits.dtype).itemsize,
                   jnp.dtype(targets.dtype).itemsize)
    # Packed-sublane multiple for the input dtype: 8 (f32) / 16 (bf16) / 32 (i8).
    pack = SUBLANE * max(1, 4 // int(itemsize))

    if n_elems % LANE == 0:
        # Common case: free reshape to a lane-major (B, rows, 128) view, zero copies.
        rows = n_elems // LANE
        logits3d = logits.reshape(batch, rows, LANE)
        targets3d = targets.reshape(batch, rows, LANE)
    else:
        # TODO(synk): lane-ragged inputs (n_elems % 128 != 0) still need one pad
        # copy to get a 128-lane view; a fully copy-free path would need manual
        # byte-offset DMA from the flat buffer with per-element index masking.
        rows = ((pl.cdiv(n_elems, LANE) + pack - 1) // pack) * pack
        extra = rows * LANE - n_elems
        logits3d = jnp.pad(logits.reshape(batch, n_elems), ((0, 0), (0, extra)),
                           constant_values=-100.0).reshape(batch, rows, LANE)
        targets3d = jnp.pad(targets.reshape(batch, n_elems), ((0, 0), (0, extra)),
                            constant_values=0.0).reshape(batch, rows, LANE)

    vmem_limit = _vmem_limit_bytes()
    tile_r, n_tiles = _choose_tile_rows(batch, rows, itemsize, pack,
                                        max_tile_rows, vmem_limit)

    # Split the row-tile loop across TensorCores (megacore / v7x); each split
    # produces its own partial sums, combined in the JAX finalize below.
    n_splits = 2 if (num_core_splits >= 2 and n_tiles >= 2) else 1
    tiles_per_core = pl.cdiv(n_tiles, n_splits)
    has_dup_steps = n_splits * tiles_per_core > n_tiles
    ragged = (rows % tile_r) != 0
    b_pad = ((batch + SUBLANE - 1) // SUBLANE) * SUBLANE

    kernel = functools.partial(
        _partial_sums_kernel,
        b=batch, b_pad=b_pad, tile_r=tile_r, rows=rows, n_tiles=n_tiles,
        tiles_per_core=tiles_per_core, ragged=ragged,
        has_dup_steps=has_dup_steps)

    def in_map(p, r):
        # Clamp so over-coverage steps re-read the last valid tile (never a fully
        # out-of-bounds DMA).
        return (0, jnp.minimum(p * tiles_per_core + r, n_tiles - 1), 0)

    grid_spec = pltpu.PrefetchScalarGridSpec(
        num_scalar_prefetch=0,
        grid=(n_splits, tiles_per_core),
        in_specs=[
            pl.BlockSpec((batch, tile_r, LANE), in_map),
            pl.BlockSpec((batch, tile_r, LANE), in_map),
        ],
        out_specs=pl.BlockSpec((1, 4, b_pad, LANE), lambda p, r: (p, 0, 0, 0)),
        scratch_shapes=[pltpu.VMEM((4, b_pad, LANE), jnp.float32)],
    )

    partials = pl.pallas_call(
        kernel,
        out_shape=jax.ShapeDtypeStruct((n_splits, 4, b_pad, LANE), jnp.float32),
        grid_spec=grid_spec,
        compiler_params=pltpu.CompilerParams(
            dimension_semantics=("parallel", "arbitrary"),
            vmem_limit_bytes=vmem_limit,
        ),
    )(logits3d, targets3d)

    # Tiny finalize in plain JAX (per-sample scalars only).
    stats = jnp.sum(partials, axis=(0, 3))[:, :batch]       # (4, batch)
    tp, sum_p, sum_t, bce_sum = stats[0], stats[1], stats[2], stats[3]
    fp = ALPHA * (sum_p - tp)
    fn = BETA * (sum_t - tp)
    tversky = (tp + SMOOTH) / (tp + fp + fn + SMOOTH)
    focal_loss = jnp.mean(jnp.maximum(1.0 - tversky, 0.0) ** 0.75)
    dice = (2.0 * tp + SMOOTH) / (sum_p + sum_t + SMOOTH)
    dice_loss = 1.0 - jnp.mean(dice)
    bce_loss = jnp.sum(bce_sum) / float(batch * n_elems)
    return DICE_W * dice_loss + FOCAL_W * focal_loss + BCE_W * bce_loss


def _reference_loss(logits, targets):
    """Pure-JAX reference mirroring the PyTorch forward, for verification."""
    b = logits.shape[0]
    x = logits.reshape(b, -1).astype(jnp.float32)
    t = targets.reshape(b, -1).astype(jnp.float32)
    probs = jax.nn.sigmoid(x)
    tp = jnp.sum(probs * t, axis=1)
    fp = jnp.sum(probs * (1 - t), axis=1) * ALPHA
    fn = jnp.sum((1 - probs) * t, axis=1) * BETA
    tversky = (tp + SMOOTH) / (tp + fp + fn + SMOOTH)
    focal_loss = jnp.mean((1 - tversky) ** 0.75)
    dice = (2 * tp + SMOOTH) / (jnp.sum(probs, axis=1) + jnp.sum(t, axis=1) + SMOOTH)
    dice_loss = 1 - jnp.mean(dice)
    bce = jnp.mean(jnp.maximum(x, 0) - x * t + jnp.log1p(jnp.exp(-jnp.abs(x))))
    return DICE_W * dice_loss + FOCAL_W * focal_loss + BCE_W * bce


if __name__ == "__main__":
    key = jax.random.PRNGKey(0)
    k1, k2, k3, k4 = jax.random.split(key, 4)

    def make_case(kl, kt, shape):
        lg = jax.random.normal(kl, shape, dtype=jnp.float32)
        tg = (jax.random.uniform(kt, shape) < 0.3).astype(jnp.float32)
        return lg, tg

    checks = []

    # Binary segmentation logits / targets: (B, 1, H, W).
    lg, tg = make_case(k1, k2, (2, 1, 64, 64))
    ref = _reference_loss(lg, tg)
    checks.append(("single-tile", dice_focal_loss(lg, tg), ref))
    checks.append(("multi-tile-split",
                   dice_focal_loss(lg, tg, max_tile_rows=8), ref))

    # 48x48 -> 2304 elems = 18 rows of 128: zero-copy, ragged last tile plus a
    # duplicate (gated) grid step on the second core split.
    lg, tg = make_case(k3, k4, (2, 1, 48, 48))
    ref = _reference_loss(lg, tg)
    checks.append(("ragged-rows", dice_focal_loss(lg, tg, max_tile_rows=8), ref))

    # 40x40 -> 1600 elems (not a multiple of 128): the only remaining pad path.
    lg, tg = make_case(k4, k3, (2, 1, 40, 40))
    ref = _reference_loss(lg, tg)
    checks.append(("lane-ragged-pad", dice_focal_loss(lg, tg), ref))

    for name, got, want in checks:
        got = jax.block_until_ready(got)
        g = float(got)
        w = float(jax.block_until_ready(want))
        assert math.isfinite(g), f"{name}: non-finite loss {g}"
        assert abs(g - w) < 2e-4, (name, g, w)

    print("KERNEL_OK")
</pallas_src>

<mosaic_0001>
module attributes {stable_mosaic.version = 11 : i64} {
  func.func @_partial_sums_kernel(%arg0: i32, %arg1: i32, %arg2: memref<2x32x128xf32, #tpu.memory_space<vmem>>, %arg3: memref<2x32x128xf32, #tpu.memory_space<vmem>>, %arg4: memref<1x4x8x128xf32, #tpu.memory_space<vmem>>, %arg5: memref<4x8x128xf32, #tpu.memory_space<vmem>>) attributes {dimension_semantics = [#tpu.dimension_semantics<parallel>, #tpu.dimension_semantics<arbitrary>], iteration_bounds = array<i64: 1, 1>, scalar_prefetch = 0 : i64, scratch_operands = 1 : i64, tpu.core_type = #tpu.core_type<tc>, window_params = [{transform_indices = @transform_0, window_bounds = array<i64: 2, 32, 128>}, {transform_indices = @transform_1, window_bounds = array<i64: 2, 32, 128>}, {transform_indices = @transform_2, window_bounds = array<i64: 1, 4, 8, 128>}]} {
    %c0_i32 = arith.constant 0 : i32
    %0 = arith.cmpi eq, %arg1, %c0_i32 : i32
    %1 = arith.extui %0 : i1 to i32
    %c0_i32_0 = arith.constant 0 : i32
    %2 = arith.cmpi ne, %1, %c0_i32_0 : i32
    scf.if %2 {
      %cst_39 = arith.constant 0.000000e+00 : f32
      %72 = vector.broadcast %cst_39 : f32 to vector<4x8x128xf32>
      %c0_40 = arith.constant 0 : index
      %c0_41 = arith.constant 0 : index
      %c0_42 = arith.constant 0 : index
      %73 = vector.load %arg5[%c0_40, %c0_41, %c0_42] : memref<4x8x128xf32, #tpu.memory_space<vmem>>, vector<4x8x128xf32>
      tpu.vector_store %arg5[%c0_40, %c0_41, %c0_42], %72 {strides = array<i32>} : memref<4x8x128xf32, #tpu.memory_space<vmem>>, vector<4x8x128xf32>,
    } else {
    }
    %c0 = arith.constant 0 : index
    %c0_1 = arith.constant 0 : index
    %c0_2 = arith.constant 0 : index
    %3 = vector.load %arg2[%c0, %c0_1, %c0_2] : memref<2x32x128xf32, #tpu.memory_space<vmem>>, vector<2x32x128xf32>
    %c0_3 = arith.constant 0 : index
    %c0_4 = arith.constant 0 : index
    %c0_5 = arith.constant 0 : index
    %4 = vector.load %arg3[%c0_3, %c0_4, %c0_5] : memref<2x32x128xf32, #tpu.memory_space<vmem>>, vector<2x32x128xf32>
    %cst = arith.constant 5.000000e-01 : f32
    %5 = vector.broadcast %cst : f32 to vector<2x32x128xf32>
    %6 = arith.mulf %5, %3 : vector<2x32x128xf32>
    %7 = math.tanh %6 : vector<2x32x128xf32>
    %cst_6 = arith.constant 5.000000e-01 : f32
    %8 = vector.broadcast %cst_6 : f32 to vector<2x32x128xf32>
    %9 = arith.mulf %8, %7 : vector<2x32x128xf32>
    %cst_7 = arith.constant 5.000000e-01 : f32
    %10 = vector.broadcast %cst_7 : f32 to vector<2x32x128xf32>
    %11 = arith.addf %9, %10 : vector<2x32x128xf32>
    %cst_8 = arith.constant 0.000000e+00 : f32
    %12 = vector.broadcast %cst_8 : f32 to vector<2x32x128xf32>
    %13 = arith.cmpf oge, %3, %12 : vector<2x32x128xf32>
    %cst_9 = arith.constant 1.000000e+00 : f32
    %14 = vector.broadcast %cst_9 : f32 to vector<2x32x128xf32>
    %15 = arith.subf %14, %11 : vector<2x32x128xf32>
    %16 = arith.select %13, %11, %15 : vector<2x32x128xi1>, vector<2x32x128xf32>
    %cst_10 = arith.constant 0.000000e+00 : f32
    %17 = vector.broadcast %cst_10 : f32 to vector<2x32x128xf32>
    %18 = arith.maximumf %3, %17 : vector<2x32x128xf32>
    %19 = arith.mulf %3, %4 : vector<2x32x128xf32>
    %20 = arith.subf %18, %19 : vector<2x32x128xf32>
    %21 = math.log %16 : vector<2x32x128xf32>
    %22 = arith.subf %20, %21 : vector<2x32x128xf32>
    %23 = tpu.iota {dimensions = array<i32: 1>} : vector<8x64xi32>
    %24 = tpu.iota {dimensions = array<i32: 0>} : vector<8x64xi32>
    %c32_i32 = arith.constant 32 : i32
    %25 = vector.broadcast %c32_i32 : i32 to vector<8x64xi32>
    %26 = arith.muli %24, %25 : vector<8x64xi32>
    %27 = arith.cmpi sge, %23, %26 : vector<8x64xi32>
    %c1_i32 = arith.constant 1 : i32
    %28 = vector.broadcast %c1_i32 : i32 to vector<8x64xi32>
    %29 = arith.addi %24, %28 : vector<8x64xi32>
    %c32_i32_11 = arith.constant 32 : i32
    %30 = vector.broadcast %c32_i32_11 : i32 to vector<8x64xi32>
    %31 = arith.muli %29, %30 : vector<8x64xi32>
    %32 = arith.cmpi slt, %23, %31 : vector<8x64xi32>
    %33 = arith.andi %27, %32 : vector<8x64xi1>
    %34 = arith.extui %33 : vector<8x64xi1> to vector<8x64xi32>
    %35 = arith.sitofp %34 : vector<8x64xi32> to vector<8x64xf32>
    %36 = arith.mulf %11, %4 : vector<2x32x128xf32>
    %37 = vector.shape_cast %36 : vector<2x32x128xf32> to vector<64x128xf32>
    %cst_12 = arith.constant dense<0.000000e+00> : vector<8x128xf32>
    %38 = tpu.matmul %35, %37, %cst_12 {dimension_numbers = #tpu.dot_dimension_numbers<[1], [0], [0], [1], [0, 0, 1, 1], [], []>} : vector<8x64xf32>, vector<64x128xf32>, vector<8x128xf32> -> vector<8x128xf32>
    %39 = vector.shape_cast %11 : vector<2x32x128xf32> to vector<64x128xf32>
    %cst_13 = arith.constant dense<0.000000e+00> : vector<8x128xf32>
    %40 = tpu.matmul %35, %39, %cst_13 {dimension_numbers = #tpu.dot_dimension_numbers<[1], [0], [0], [1], [0, 0, 1, 1], [], []>} : vector<8x64xf32>, vector<64x128xf32>, vector<8x128xf32> -> vector<8x128xf32>
    %41 = vector.shape_cast %4 : vector<2x32x128xf32> to vector<64x128xf32>
    %cst_14 = arith.constant dense<0.000000e+00> : vector<8x128xf32>
    %42 = tpu.matmul %35, %41, %cst_14 {dimension_numbers = #tpu.dot_dimension_numbers<[1], [0], [0], [1], [0, 0, 1, 1], [], []>} : vector<8x64xf32>, vector<64x128xf32>, vector<8x128xf32> -> vector<8x128xf32>
    %43 = vector.shape_cast %22 : vector<2x32x128xf32> to vector<64x128xf32>
    %cst_15 = arith.constant dense<0.000000e+00> : vector<8x128xf32>
    %44 = tpu.matmul %35, %43, %cst_15 {dimension_numbers = #tpu.dot_dimension_numbers<[1], [0], [0], [1], [0, 0, 1, 1], [], []>} : vector<8x64xf32>, vector<64x128xf32>, vector<8x128xf32> -> vector<8x128xf32>
    %c0_16 = arith.constant 0 : index
    %c0_17 = arith.constant 0 : index
    %c0_18 = arith.constant 0 : index
    %45 = vector.load %arg5[%c0_16, %c0_17, %c0_18] : memref<4x8x128xf32, #tpu.memory_space<vmem>>, vector<1x8x128xf32>
    %46 = vector.shape_cast %45 : vector<1x8x128xf32> to vector<8x128xf32>
    %47 = arith.addf %46, %38 : vector<8x128xf32>
    %c0_19 = arith.constant 0 : index
    %c0_20 = arith.constant 0 : index
    %c0_21 = arith.constant 0 : index
    %48 = vector.load %arg5[%c0_19, %c0_20, %c0_21] : memref<4x8x128xf32, #tpu.memory_space<vmem>>, vector<1x8x128xf32>
    %49 = vector.shape_cast %48 : vector<1x8x128xf32> to vector<8x128xf32>
    %50 = vector.shape_cast %47 : vector<8x128xf32> to vector<1x8x128xf32>
    tpu.vector_store %arg5[%c0_19, %c0_20, %c0_21], %50 {strides = array<i32>} : memref<4x8x128xf32, #tpu.memory_space<vmem>>, vector<1x8x128xf32>,
    %c1 = arith.constant 1 : index
    %c0_22 = arith.constant 0 : index
    %c0_23 = arith.constant 0 : index
    %51 = vector.load %arg5[%c1, %c0_22, %c0_23] : memref<4x8x128xf32, #tpu.memory_space<vmem>>, vector<1x8x128xf32>
    %52 = vector.shape_cast %51 : vector<1x8x128xf32> to vector<8x128xf32>
    %53 = arith.addf %52, %40 : vector<8x128xf32>
    %c1_24 = arith.constant 1 : index
    %c0_25 = arith.constant 0 : index
    %c0_26 = arith.constant 0 : index
    %54 = vector.load %arg5[%c1_24, %c0_25, %c0_26] : memref<4x8x128xf32, #tpu.memory_space<vmem>>, vector<1x8x128xf32>
    %55 = vector.shape_cast %54 : vector<1x8x128xf32> to vector<8x128xf32>
    %56 = vector.shape_cast %53 : vector<8x128xf32> to vector<1x8x128xf32>
    tpu.vector_store %arg5[%c1_24, %c0_25, %c0_26], %56 {strides = array<i32>} : memref<4x8x128xf32, #tpu.memory_space<vmem>>, vector<1x8x128xf32>,
    %c2 = arith.constant 2 : index
    %c0_27 = arith.constant 0 : index
    %c0_28 = arith.constant 0 : index
    %57 = vector.load %arg5[%c2, %c0_27, %c0_28] : memref<4x8x128xf32, #tpu.memory_space<vmem>>, vector<1x8x128xf32>
    %58 = vector.shape_cast %57 : vector<1x8x128xf32> to vector<8x128xf32>
    %59 = arith.addf %58, %42 : vector<8x128xf32>
    %c2_29 = arith.constant 2 : index
    %c0_30 = arith.constant 0 : index
    %c0_31 = arith.constant 0 : index
    %60 = vector.load %arg5[%c2_29, %c0_30, %c0_31] : memref<4x8x128xf32, #tpu.memory_space<vmem>>, vector<1x8x128xf32>
    %61 = vector.shape_cast %60 : vector<1x8x128xf32> to vector<8x128xf32>
    %62 = vector.shape_cast %59 : vector<8x128xf32> to vector<1x8x128xf32>
    tpu.vector_store %arg5[%c2_29, %c0_30, %c0_31], %62 {strides = array<i32>} : memref<4x8x128xf32, #tpu.memory_space<vmem>>, vector<1x8x128xf32>,
    %c3 = arith.constant 3 : index
    %c0_32 = arith.constant 0 : index
    %c0_33 = arith.constant 0 : index
    %63 = vector.load %arg5[%c3, %c0_32, %c0_33] : memref<4x8x128xf32, #tpu.memory_space<vmem>>, vector<1x8x128xf32>
    %64 = vector.shape_cast %63 : vector<1x8x128xf32> to vector<8x128xf32>
    %65 = arith.addf %64, %44 : vector<8x128xf32>
    %c3_34 = arith.constant 3 : index
    %c0_35 = arith.constant 0 : index
    %c0_36 = arith.constant 0 : index
    %66 = vector.load %arg5[%c3_34, %c0_35, %c0_36] : memref<4x8x128xf32, #tpu.memory_space<vmem>>, vector<1x8x128xf32>
    %67 = vector.shape_cast %66 : vector<1x8x128xf32> to vector<8x128xf32>
    %68 = vector.shape_cast %65 : vector<8x128xf32> to vector<1x8x128xf32>
    tpu.vector_store %arg5[%c3_34, %c0_35, %c0_36], %68 {strides = array<i32>} : memref<4x8x128xf32, #tpu.memory_space<vmem>>, vector<1x8x128xf32>,
    %c0_i32_37 = arith.constant 0 : i32
    %69 = arith.cmpi eq, %arg1, %c0_i32_37 : i32
    %70 = arith.extui %69 : i1 to i32
    %c0_i32_38 = arith.constant 0 : i32
    %71 = arith.cmpi ne, %70, %c0_i32_38 : i32
    scf.if %71 {
      %c0_39 = arith.constant 0 : index
      %c0_40 = arith.constant 0 : index
      %c0_41 = arith.constant 0 : index
      %72 = vector.load %arg5[%c0_39, %c0_40, %c0_41] : memref<4x8x128xf32, #tpu.memory_space<vmem>>, vector<4x8x128xf32>
      %c0_42 = arith.constant 0 : index
      %c0_43 = arith.constant 0 : index
      %c0_44 = arith.constant 0 : index
      %c0_45 = arith.constant 0 : index
      %73 = vector.load %arg4[%c0_42, %c0_43, %c0_44, %c0_45] : memref<1x4x8x128xf32, #tpu.memory_space<vmem>>, vector<1x4x8x128xf32>
      %74 = vector.shape_cast %73 : vector<1x4x8x128xf32> to vector<4x8x128xf32>
      %75 = vector.shape_cast %72 : vector<4x8x128xf32> to vector<1x4x8x128xf32>
      tpu.vector_store %arg4[%c0_42, %c0_43, %c0_44, %c0_45], %75 {strides = array<i32>} : memref<1x4x8x128xf32, #tpu.memory_space<vmem>>, vector<1x4x8x128xf32>,
    } else {
    }
    return
  }
  func.func @transform_0(%arg0: i32, %arg1: i32) -> (i32, i32, i32) {
    %c1_i32 = arith.constant 1 : i32
    %0 = arith.muli %arg0, %c1_i32 : i32
    %1 = arith.addi %0, %arg1 : i32
    %c0_i32 = arith.constant 0 : i32
    %2 = arith.minsi %1, %c0_i32 : i32
    %c0_i32_0 = arith.constant 0 : i32
    %c0_i32_1 = arith.constant 0 : i32
    %c0_i32_2 = arith.constant 0 : i32
    return %c0_i32_0, %2, %c0_i32_1 : i32, i32, i32
  }
  func.func @transform_1(%arg0: i32, %arg1: i32) -> (i32, i32, i32) {
    %c1_i32 = arith.constant 1 : i32
    %0 = arith.muli %arg0, %c1_i32 : i32
    %1 = arith.addi %0, %arg1 : i32
    %c0_i32 = arith.constant 0 : i32
    %2 = arith.minsi %1, %c0_i32 : i32
    %c0_i32_0 = arith.constant 0 : i32
    %c0_i32_1 = arith.constant 0 : i32
    %c0_i32_2 = arith.constant 0 : i32
    return %c0_i32_0, %2, %c0_i32_1 : i32, i32, i32
  }
  func.func @transform_2(%arg0: i32, %arg1: i32) -> (i32, i32, i32, i32) {
    %c0_i32 = arith.constant 0 : i32
    %c0_i32_0 = arith.constant 0 : i32
    %c0_i32_1 = arith.constant 0 : i32
    %c0_i32_2 = arith.constant 0 : i32
    return %arg0, %c0_i32, %c0_i32_0, %c0_i32_1 : i32, i32, i32, i32
  }
}

</mosaic_0001>

<llo_original>
// kernel: tpu_custom_call.1
$region0: #{tpu_custom_call.1}
  #allocation0 [shape = 'u32[]', space=smem, size = 0x4, offset = 0x4, fixed_abs, tag = 'smem constant byte address 0x4 - core index']
  #allocation1 [shape = 'u32[144,128]{1,0:T(1,128)}', space=vmem, size = 0x12000, scoped, tag = 'internal scratch']
  #allocation2 [shape = 'f32[4,8,128]{2,1,0:T(8,128)}', space=vmem, size = 0x4000, scoped, tag = 'scratch operand']
  %s0 = inlined_call_operand.hbm [shape: f32[2,32,128], index: 0, kind: input, shape index: {}]
  %s1 = inlined_call_operand.hbm [shape: f32[2,32,128], index: 1, kind: input, shape index: {}]
  %s2 = inlined_call_operand.hbm [shape: f32[1,4,8,128], index: 2, kind: output, shape index: {}]
  %s3 = sld [smem:[#allocation0]]
  $region34: #{tpu_custom_call.1} parent=0
    _
  %s5 = ssub.s32 1, %s3
  %s6 = scalar_select 0, %s5, %s3
  $region1: #{tpu_custom_call.1} parent=0
    #allocation3 [shape = 'u8[32768]{0}', space=vmem, size = 0x8000, scoped, tag = 'input window, operand 0, single buffered']
    #allocation4 [shape = 's32[1]{0}', space=sflag, size = 0x4, scoped, tag = 'scoped memory for tpu_custom_call.1']
    #allocation5 [shape = 's32[1]{0}', space=sflag, size = 0x4, scoped, tag = 'scoped memory for tpu_custom_call.1']
    #allocation6 [shape = 'u8[32768]{0}', space=vmem, size = 0x8000, scoped, tag = 'input window, operand 1, single buffered']
    #allocation7 [shape = 's32[1]{0}', space=sflag, size = 0x4, scoped, tag = 'scoped memory for tpu_custom_call.1']
    #allocation8 [shape = 'u8[16384]{0}', space=vmem, size = 0x4000, scoped, tag = 'output window, operand 0, single buffered']
    %7 = vsyncpa [#allocation4], 0
    %8 = vsyncpa [#allocation7], 0
    %9 = vsyncpa [#allocation5], 0
    // Predicated region
    $region2: #{tpu_custom_call.1} parent=1 // pred_check
      _
    $region3: #{tpu_custom_call.1} parent=1 // pred_check_branch
      %11 = sbr.rel (0) target = $region5
    $region4: #{tpu_custom_call.1} parent=1 // pred_region
      %s12 = sadd.s32 0, 0
      %p13 = scmp.lt.s32.totalorder %s12, 0
      %s14 = scalar_select %p13, %s12, 0
      %s15 = smul.u32 4, %s14
      %s17 = ssub.s32 1024, 1024
      %18 = vsyncadd [#allocation4], %s17
      %s19 = smul.addr %s15, 128
      %s20 = scalar_lea.hbm %s0, %s19
      %s21 = sshll.u32 [#allocation3], 4
      %s22 = int_to_ptr.vmem [resolvable:$true] %s21
      %27 = dma.hbm_to_vmem [thread:$0]  %s20, 1024, %s22, [#allocation4], 128, 128, 8
    $region5: #{tpu_custom_call.1} parent=1 // pred_fallthru
      _
    // Predicated region
    $region6: #{tpu_custom_call.1} parent=1 // pred_check
      _
    $region7: #{tpu_custom_call.1} parent=1 // pred_check_branch
      %29 = sbr.rel (0) target = $region9
    $region8: #{tpu_custom_call.1} parent=1 // pred_region
      %s30 = sadd.s32 0, 0
      %p31 = scmp.lt.s32.totalorder %s30, 0
      %s32 = scalar_select %p31, %s30, 0
      %s33 = smul.u32 4, %s32
      %s35 = ssub.s32 1024, 1024
      %36 = vsyncadd [#allocation7], %s35
      %s37 = smul.addr %s33, 128
      %s38 = scalar_lea.hbm %s1, %s37
      %s39 = sshll.u32 [#allocation6], 4
      %s40 = int_to_ptr.vmem [resolvable:$true] %s39
      %45 = dma.hbm_to_vmem [thread:$0]  %s38, 1024, %s40, [#allocation7], 128, 128, 8
    $region9: #{tpu_custom_call.1} parent=1 // pred_fallthru
      _
    // Predicated region
    $region10: #{tpu_custom_call.1} parent=1 // pred_check
      _
    $region11: #{tpu_custom_call.1} parent=1 // pred_check_branch
      %47 = sbr.rel (0) target = $region13
    $region12: #{tpu_custom_call.1} parent=1 // pred_region
      %48 = dma.done [#allocation4], 1024
    $region13: #{tpu_custom_call.1} parent=1 // pred_fallthru
      _
    // Predicated region
    $region14: #{tpu_custom_call.1} parent=1 // pred_check
      _
    $region15: #{tpu_custom_call.1} parent=1 // pred_check_branch
      %50 = sbr.rel (0) target = $region17
    $region16: #{tpu_custom_call.1} parent=1 // pred_region
      %51 = dma.done [#allocation7], 1024
    $region17: #{tpu_custom_call.1} parent=1 // pred_fallthru
      _
    %s52 = sadd.s32 0, 0
    %p53 = scmp.lt.s32.totalorder %s52, 0
    %s54 = scalar_select %p53, %s52, 0
    %s55 = smul.u32 4, %s54
    %s56 = sadd.s32 0, 0
    %p57 = scmp.lt.s32.totalorder %s56, 0
    %s58 = scalar_select %p57, %s56, 0
    %s59 = smul.u32 4, %s58
    %p60 = scmp.eq.s32.totalorder 0, 0
    // Predicated region
    $region18: #{tpu_custom_call.1} parent=1 // pred_check
      %p61 = pneg %p60
    $region19: #{tpu_custom_call.1} parent=1 // pred_check_branch
      %63 = sbr.rel (%p61) target = $region21
    $region20: #{tpu_custom_call.1} parent=1 // pred_region
      %64 = vst [vmem:[#allocation2] sm:$0xff] 0.0
      %65 = vst [vmem:[#allocation2 + $0x8] sm:$0xff] 0.0
      %66 = vst [vmem:[#allocation2 + $0x10] sm:$0xff] 0.0
      %67 = vst [vmem:[#allocation2 + $0x18] sm:$0xff] 0.0
    $region21: #{tpu_custom_call.1} parent=1 // pred_fallthru
      _
    %v68 = vld [vmem:[#allocation3] sm:$0xff]
    %v69 = vld [vmem:[#allocation3 + $0x8] sm:$0xff]
    %v70 = vld [vmem:[#allocation3 + $0x10] sm:$0xff]
    %v71 = vld [vmem:[#allocation3 + $0x18] sm:$0xff]
    %v72 = vld [vmem:[#allocation3 + $0x20] sm:$0xff]
    %v73 = vld [vmem:[#allocation3 + $0x28] sm:$0xff]
    %v74 = vld [vmem:[#allocation3 + $0x30] sm:$0xff]
    %v75 = vld [vmem:[#allocation3 + $0x38] sm:$0xff]
    %v76 = vld [vmem:[#allocation6] sm:$0xff]
    %v77 = vld [vmem:[#allocation6 + $0x8] sm:$0xff]
    %v78 = vld [vmem:[#allocation6 + $0x10] sm:$0xff]
    %v79 = vld [vmem:[#allocation6 + $0x18] sm:$0xff]
    %v80 = vld [vmem:[#allocation6 + $0x20] sm:$0xff]
    %v81 = vld [vmem:[#allocation6 + $0x28] sm:$0xff]
    %v82 = vld [vmem:[#allocation6 + $0x30] sm:$0xff]
    %v83 = vld [vmem:[#allocation6 + $0x38] sm:$0xff]
    %v84 = vmul.f32 %v68, 0.5
    %v85 = vmul.f32 %v69, 0.5
    %v86 = vmul.f32 %v70, 0.5
    %v87 = vmul.f32 %v71, 0.5
    %v88 = vmul.f32 %v72, 0.5
    %v89 = vmul.f32 %v73, 0.5
    %v90 = vmul.f32 %v74, 0.5
    %v91 = vmul.f32 %v75, 0.5
    %v92 = vtanh.pop %v84
    %v93 = vtanh.pop %v85
    %v94 = vtanh.pop %v86
    %v95 = vtanh.pop %v87
    %v96 = vtanh.pop %v88
    %v97 = vtanh.pop %v89
    %v98 = vtanh.pop %v90
    %v99 = vtanh.pop %v91
    %v100 = vmul.f32 %v92, 0.5
    %v101 = vmul.f32 %v93, 0.5
    %v102 = vmul.f32 %v94, 0.5
    %v103 = vmul.f32 %v95, 0.5
    %v104 = vmul.f32 %v96, 0.5
    %v105 = vmul.f32 %v97, 0.5
    %v106 = vmul.f32 %v98, 0.5
    %v107 = vmul.f32 %v99, 0.5
    %v108 = vadd.f32 %v100, 0.5
    %v109 = vadd.f32 %v101, 0.5
    %v110 = vadd.f32 %v102, 0.5
    %v111 = vadd.f32 %v103, 0.5
    %v112 = vadd.f32 %v104, 0.5
    %v113 = vadd.f32 %v105, 0.5
    %v114 = vadd.f32 %v106, 0.5
    %v115 = vadd.f32 %v107, 0.5
    %vm116 = vcmp.ge.f32.partialorder %v68, 0.0
    %vm117 = vcmp.ge.f32.partialorder %v69, 0.0
    %vm118 = vcmp.ge.f32.partialorder %v70, 0.0
    %vm119 = vcmp.ge.f32.partialorder %v71, 0.0
    %vm120 = vcmp.ge.f32.partialorder %v72, 0.0
    %vm121 = vcmp.ge.f32.partialorder %v73, 0.0
    %vm122 = vcmp.ge.f32.partialorder %v74, 0.0
    %vm123 = vcmp.ge.f32.partialorder %v75, 0.0
    %v124 = vsub.f32 1.0, %v108
    %v125 = vsub.f32 1.0, %v109
    %v126 = vsub.f32 1.0, %v110
    %v127 = vsub.f32 1.0, %v111
    %v128 = vsub.f32 1.0, %v112
    %v129 = vsub.f32 1.0, %v113
    %v130 = vsub.f32 1.0, %v114
    %v131 = vsub.f32 1.0, %v115
    %v132 = vsel %vm116, %v108, %v124
    %v133 = vsel %vm117, %v109, %v125
    %v134 = vsel %vm118, %v110, %v126
    %v135 = vsel %vm119, %v111, %v127
    %v136 = vsel %vm120, %v112, %v128
    %v137 = vsel %vm121, %v113, %v129
    %v138 = vsel %vm122, %v114, %v130
    %v139 = vsel %vm123, %v115, %v131
    %v140 = vmax.f32 %v68, 0.0
    %v141 = vmax.f32 %v69, 0.0
    %v142 = vmax.f32 %v70, 0.0
    %v143 = vmax.f32 %v71, 0.0
    %v144 = vmax.f32 %v72, 0.0
    %v145 = vmax.f32 %v73, 0.0
    %v146 = vmax.f32 %v74, 0.0
    %v147 = vmax.f32 %v75, 0.0
    %v148 = vmul.f32 %v68, %v76
    %v149 = vmul.f32 %v69, %v77
    %v150 = vmul.f32 %v70, %v78
    %v151 = vmul.f32 %v71, %v79
    %v152 = vmul.f32 %v72, %v80
    %v153 = vmul.f32 %v73, %v81
    %v154 = vmul.f32 %v74, %v82
    %v155 = vmul.f32 %v75, %v83
    %v156 = vsub.f32 %v140, %v148
    %v157 = vsub.f32 %v141, %v149
    %v158 = vsub.f32 %v142, %v150
    %v159 = vsub.f32 %v143, %v151
    %v160 = vsub.f32 %v144, %v152
    %v161 = vsub.f32 %v145, %v153
    %v162 = vsub.f32 %v146, %v154
    %v163 = vsub.f32 %v147, %v155
    %v164 = vlog2.pop %v132
    %v165 = vmul.f32 %v164, 0.6931472
    %v166 = vlog2.pop %v133
    %v167 = vmul.f32 %v166, 0.6931472
    %v168 = vlog2.pop %v134
    %v169 = vmul.f32 %v168, 0.6931472
    %v170 = vlog2.pop %v135
    %v171 = vmul.f32 %v170, 0.6931472
    %v172 = vlog2.pop %v136
    %v173 = vmul.f32 %v172, 0.6931472
    %v174 = vlog2.pop %v137
    %v175 = vmul.f32 %v174, 0.6931472
    %v176 = vlog2.pop %v138
    %v177 = vmul.f32 %v176, 0.6931472
    %v178 = vlog2.pop %v139
    %v179 = vmul.f32 %v178, 0.6931472
    %v180 = vsub.f32 %v156, %v165
    %v181 = vsub.f32 %v157, %v167
    %v182 = vsub.f32 %v158, %v169
    %v183 = vsub.f32 %v159, %v171
    %v184 = vsub.f32 %v160, %v173
    %v185 = vsub.f32 %v161, %v175
    %v186 = vsub.f32 %v162, %v177
    %v187 = vsub.f32 %v163, %v179
    %v188 = vlaneseq
    %v189 = vand.u32 %v188, 127
    %v190 = vlaneseq
    %v191 = vshrl.u32 %v190, 7
    %v192 = vmul.u32 %v191, 32
    %vm193 = vcmp.ge.s32.totalorder %v189, %v192
    %v194 = vadd.s32 %v191, 1
    %v195 = vmul.u32 %v194, 32
    %vm196 = vcmp.lt.s32.totalorder %v189, %v195
    %vm197 = vmand %vm193, %vm196
    %v198 = vsel %vm197, 1, 0
    %v199 = vcvt.s32.f32 %v198
    %v200 = vmul.f32 %v108, %v76
    %v201 = vmul.f32 %v109, %v77
    %v202 = vmul.f32 %v110, %v78
    %v203 = vmul.f32 %v111, %v79
    %v204 = vmul.f32 %v112, %v80
    %v205 = vmul.f32 %v113, %v81
    %v206 = vmul.f32 %v114, %v82
    %v207 = vmul.f32 %v115, %v83
    %vm208 = vcmask 523264
    %v210 = vsel %vm208, %v199, 0
    %212 = vmatprep.subr.mxu0 0.0
    %213 = vmatpush1.msra.mxu0 %v200
    %214 = vmatprep.subr.mxu0 0.0
    %215 = vmatpush1.msra.mxu0 %v201
    %216 = vmatprep.subr.mxu0 0.0
    %217 = vmatpush1.msra.mxu0 %v202
    %218 = vmatprep.subr.mxu0 0.0
    %219 = vmatpush1.msra.mxu0 %v203
    %220 = vmatprep.subr.mxu0 0.0
    %221 = vmatpush1.msra.mxu0 %v204
    %222 = vmatprep.subr.mxu0 0.0
    %223 = vmatpush1.msra.mxu0 %v205
    %224 = vmatprep.subr.mxu0 0.0
    %225 = vmatpush1.msra.mxu0 %v206
    %226 = vmatprep.subr.mxu0 0.0
    %227 = vmatpush1.msra.mxu0 %v207
    %228 = vmatprep.subr.mxu0 0.0
    %229 = vmatpush1.msra.mxu0 0.0
    %230 = vmatprep.subr.mxu0 0.0
    %231 = vmatpush1.msra.mxu0 0.0
    %232 = vmatprep.subr.mxu0 0.0
    %233 = vmatpush1.msra.mxu0 0.0
    %234 = vmatprep.subr.mxu0 0.0
    %235 = vmatpush1.msra.mxu0 0.0
    %236 = vmatprep.subr.mxu0 0.0
    %237 = vmatpush1.msra.mxu0 0.0
    %238 = vmatprep.subr.mxu0 0.0
    %239 = vmatpush1.msra.mxu0 0.0
    %240 = vmatprep.subr.mxu0 0.0
    %241 = vmatpush1.msra.mxu0 0.0
    %242 = vmatprep.subr.mxu0 0.0
    %243 = vmatpush1.msra.mxu0 0.0
    %244 = vmatprep.subr.mxu0 0.0
    %245 = vmatpush1.msra.mxu0 0.0
    %246 = vmatprep.subr.mxu0 0.0
    %247 = vmatpush1.msra.mxu0 0.0
    %248 = vmatprep.subr.mxu0 0.0
    %249 = vmatpush1.msra.mxu0 0.0
    %250 = vmatprep.subr.mxu0 0.0
    %251 = vmatpush1.msra.mxu0 0.0
    %252 = vmatprep.subr.mxu0 0.0
    %253 = vmatpush1.msra.mxu0 0.0
    %254 = vmatprep.subr.mxu0 0.0
    %255 = vmatpush1.msra.mxu0 0.0
    %256 = vmatprep.subr.mxu0 0.0
    %257 = vmatpush1.msra.mxu0 0.0
    %258 = vmatprep.subr.mxu0 0.0
    %259 = vmatpush1.msra.mxu0 0.0
    %260 = vmatprep.subr.mxu0 0.0
    %261 = vmatpush1.msra.mxu0 0.0
    %262 = vmatprep.subr.mxu0 0.0
    %263 = vmatpush1.msra.mxu0 0.0
    %264 = vmatprep.subr.mxu0 0.0
    %265 = vmatpush1.msra.mxu0 0.0
    %266 = vmatprep.subr.mxu0 0.0
    %267 = vmatpush1.msra.mxu0 0.0
    %268 = vmatprep.subr.mxu0 0.0
    %269 = vmatpush1.msra.mxu0 0.0
    %270 = vmatprep.subr.mxu0 0.0
    %271 = vmatpush1.msra.mxu0 0.0
    %272 = vmatprep.subr.mxu0 0.0
    %273 = vmatpush1.msra.mxu0 0.0
    %274 = vmatprep.subr.mxu0 0.0
    %275 = vmatpush1.msra.mxu0 0.0
    %276 = vmatprep.mubr.f32.mxu0 0.0
    %277 = vmatmul.mubr.f32.gmra.mrb[0].mxu0 %v210
    %v278 = vpop.f32.mrb[0].mxu0
    %v279 = vadd.f32 0.0, %v278
    %v280 = vpop.f32.mrb[0].mxu0
    %281 = vdwg.mxu0
    %282 = vmatprep.subr.mxu0 0.0
    %283 = vmatpush1.msra.mxu0 %v108
    %284 = vmatprep.subr.mxu0 0.0
    %285 = vmatpush1.msra.mxu0 %v109
    %286 = vmatprep.subr.mxu0 0.0
    %287 = vmatpush1.msra.mxu0 %v110
    %288 = vmatprep.subr.mxu0 0.0
    %289 = vmatpush1.msra.mxu0 %v111
    %290 = vmatprep.subr.mxu0 0.0
    %291 = vmatpush1.msra.mxu0 %v112
    %292 = vmatprep.subr.mxu0 0.0
    %293 = vmatpush1.msra.mxu0 %v113
    %294 = vmatprep.subr.mxu0 0.0
    %295 = vmatpush1.msra.mxu0 %v114
    %296 = vmatprep.subr.mxu0 0.0
    %297 = vmatpush1.msra.mxu0 %v115
    %298 = vmatprep.subr.mxu0 0.0
    %299 = vmatpush1.msra.mxu0 0.0
    %300 = vmatprep.subr.mxu0 0.0
    %301 = vmatpush1.msra.mxu0 0.0
    %302 = vmatprep.subr.mxu0 0.0
    %303 = vmatpush1.msra.mxu0 0.0
    %304 = vmatprep.subr.mxu0 0.0
    %305 = vmatpush1.msra.mxu0 0.0
    %306 = vmatprep.subr.mxu0 0.0
    %307 = vmatpush1.msra.mxu0 0.0
    %308 = vmatprep.subr.mxu0 0.0
    %309 = vmatpush1.msra.mxu0 0.0
    %310 = vmatprep.subr.mxu0 0.0
    %311 = vmatpush1.msra.mxu0 0.0
    %312 = vmatprep.subr.mxu0 0.0
    %313 = vmatpush1.msra.mxu0 0.0
    %314 = vmatprep.subr.mxu0 0.0
    %315 = vmatpush1.msra.mxu0 0.0
    %316 = vmatprep.subr.mxu0 0.0
    %317 = vmatpush1.msra.mxu0 0.0
    %318 = vmatprep.subr.mxu0 0.0
    %319 = vmatpush1.msra.mxu0 0.0
    %320 = vmatprep.subr.mxu0 0.0
    %321 = vmatpush1.msra.mxu0 0.0
    %322 = vmatprep.subr.mxu0 0.0
    %323 = vmatpush1.msra.mxu0 0.0
    %324 = vmatprep.subr.mxu0 0.0
    %325 = vmatpush1.msra.mxu0 0.0
    %326 = vmatprep.subr.mxu0 0.0
    %327 = vmatpush1.msra.mxu0 0.0
    %328 = vmatprep.subr.mxu0 0.0
    %329 = vmatpush1.msra.mxu0 0.0
    %330 = vmatprep.subr.mxu0 0.0
    %331 = vmatpush1.msra.mxu0 0.0
    %332 = vmatprep.subr.mxu0 0.0
    %333 = vmatpush1.msra.mxu0 0.0
    %334 = vmatprep.subr.mxu0 0.0
    %335 = vmatpush1.msra.mxu0 0.0
    %336 = vmatprep.subr.mxu0 0.0
    %337 = vmatpush1.msra.mxu0 0.0
    %338 = vmatprep.subr.mxu0 0.0
    %339 = vmatpush1.msra.mxu0 0.0
    %340 = vmatprep.subr.mxu0 0.0
    %341 = vmatpush1.msra.mxu0 0.0
    %342 = vmatprep.subr.mxu0 0.0
    %343 = vmatpush1.msra.mxu0 0.0
    %344 = vmatprep.subr.mxu0 0.0
    %345 = vmatpush1.msra.mxu0 0.0
    %346 = vmatprep.mubr.f32.mxu0 0.0
    %347 = vmatmul.mubr.f32.gmra.mrb[0].mxu0 %v210
    %v348 = vpop.f32.mrb[0].mxu0
    %v349 = vadd.f32 0.0, %v348
    %v350 = vpop.f32.mrb[0].mxu0
    %351 = vdwg.mxu0
    %352 = vmatprep.subr.mxu0 0.0
    %353 = vmatpush1.msra.mxu0 %v76
    %354 = vmatprep.subr.mxu0 0.0
    %355 = vmatpush1.msra.mxu0 %v77
    %356 = vmatprep.subr.mxu0 0.0
    %357 = vmatpush1.msra.mxu0 %v78
    %358 = vmatprep.subr.mxu0 0.0
    %359 = vmatpush1.msra.mxu0 %v79
    %360 = vmatprep.subr.mxu0 0.0
    %361 = vmatpush1.msra.mxu0 %v80
    %362 = vmatprep.subr.mxu0 0.0
    %363 = vmatpush1.msra.mxu0 %v81
    %364 = vmatprep.subr.mxu0 0.0
    %365 = vmatpush1.msra.mxu0 %v82
    %366 = vmatprep.subr.mxu0 0.0
    %367 = vmatpush1.msra.mxu0 %v83
    %368 = vmatprep.subr.mxu0 0.0
    %369 = vmatpush1.msra.mxu0 0.0
    %370 = vmatprep.subr.mxu0 0.0
    %371 = vmatpush1.msra.mxu0 0.0
    %372 = vmatprep.subr.mxu0 0.0
    %373 = vmatpush1.msra.mxu0 0.0
    %374 = vmatprep.subr.mxu0 0.0
    %375 = vmatpush1.msra.mxu0 0.0
    %376 = vmatprep.subr.mxu0 0.0
    %377 = vmatpush1.msra.mxu0 0.0
    %378 = vmatprep.subr.mxu0 0.0
    %379 = vmatpush1.msra.mxu0 0.0
    %380 = vmatprep.subr.mxu0 0.0
    %381 = vmatpush1.msra.mxu0 0.0
    %382 = vmatprep.subr.mxu0 0.0
    %383 = vmatpush1.msra.mxu0 0.0
    %384 = vmatprep.subr.mxu0 0.0
    %385 = vmatpush1.msra.mxu0 0.0
    %386 = vmatprep.subr.mxu0 0.0
    %387 = vmatpush1.msra.mxu0 0.0
    %388 = vmatprep.subr.mxu0 0.0
    %389 = vmatpush1.msra.mxu0 0.0
    %390 = vmatprep.subr.mxu0 0.0
    %391 = vmatpush1.msra.mxu0 0.0
    %392 = vmatprep.subr.mxu0 0.0
    %393 = vmatpush1.msra.mxu0 0.0
    %394 = vmatprep.subr.mxu0 0.0
    %395 = vmatpush1.msra.mxu0 0.0
    %396 = vmatprep.subr.mxu0 0.0
    %397 = vmatpush1.msra.mxu0 0.0
    %398 = vmatprep.subr.mxu0 0.0
    %399 = vmatpush1.msra.mxu0 0.0
    %400 = vmatprep.subr.mxu0 0.0
    %401 = vmatpush1.msra.mxu0 0.0
    %402 = vmatprep.subr.mxu0 0.0
    %403 = vmatpush1.msra.mxu0 0.0
    %404 = vmatprep.subr.mxu0 0.0
    %405 = vmatpush1.msra.mxu0 0.0
    %406 = vmatprep.subr.mxu0 0.0
    %407 = vmatpush1.msra.mxu0 0.0
    %408 = vmatprep.subr.mxu0 0.0
    %409 = vmatpush1.msra.mxu0 0.0
    %410 = vmatprep.subr.mxu0 0.0
    %411 = vmatpush1.msra.mxu0 0.0
    %412 = vmatprep.subr.mxu0 0.0
    %413 = vmatpush1.msra.mxu0 0.0
    %414 = vmatprep.subr.mxu0 0.0
    %415 = vmatpush1.msra.mxu0 0.0
    %416 = vmatprep.mubr.f32.mxu0 0.0
    %417 = vmatmul.mubr.f32.gmra.mrb[0].mxu0 %v210
    %v418 = vpop.f32.mrb[0].mxu0
    %v419 = vadd.f32 0.0, %v418
    %v420 = vpop.f32.mrb[0].mxu0
    %421 = vdwg.mxu0
    %422 = vmatprep.subr.mxu0 0.0
    %423 = vmatpush1.msra.mxu0 %v180
    %424 = vmatprep.subr.mxu0 0.0
    %425 = vmatpush1.msra.mxu0 %v181
    %426 = vmatprep.subr.mxu0 0.0
    %427 = vmatpush1.msra.mxu0 %v182
    %428 = vmatprep.subr.mxu0 0.0
    %429 = vmatpush1.msra.mxu0 %v183
    %430 = vmatprep.subr.mxu0 0.0
    %431 = vmatpush1.msra.mxu0 %v184
    %432 = vmatprep.subr.mxu0 0.0
    %433 = vmatpush1.msra.mxu0 %v185
    %434 = vmatprep.subr.mxu0 0.0
    %435 = vmatpush1.msra.mxu0 %v186
    %436 = vmatprep.subr.mxu0 0.0
    %437 = vmatpush1.msra.mxu0 %v187
    %438 = vmatprep.subr.mxu0 0.0
    %439 = vmatpush1.msra.mxu0 0.0
    %440 = vmatprep.subr.mxu0 0.0
    %441 = vmatpush1.msra.mxu0 0.0
    %442 = vmatprep.subr.mxu0 0.0
    %443 = vmatpush1.msra.mxu0 0.0
    %444 = vmatprep.subr.mxu0 0.0
    %445 = vmatpush1.msra.mxu0 0.0
    %446 = vmatprep.subr.mxu0 0.0
    %447 = vmatpush1.msra.mxu0 0.0
    %448 = vmatprep.subr.mxu0 0.0
    %449 = vmatpush1.msra.mxu0 0.0
    %450 = vmatprep.subr.mxu0 0.0
    %451 = vmatpush1.msra.mxu0 0.0
    %452 = vmatprep.subr.mxu0 0.0
    %453 = vmatpush1.msra.mxu0 0.0
    %454 = vmatprep.subr.mxu0 0.0
    %455 = vmatpush1.msra.mxu0 0.0
    %456 = vmatprep.subr.mxu0 0.0
    %457 = vmatpush1.msra.mxu0 0.0
    %458 = vmatprep.subr.mxu0 0.0
    %459 = vmatpush1.msra.mxu0 0.0
    %460 = vmatprep.subr.mxu0 0.0
    %461 = vmatpush1.msra.mxu0 0.0
    %462 = vmatprep.subr.mxu0 0.0
    %463 = vmatpush1.msra.mxu0 0.0
    %464 = vmatprep.subr.mxu0 0.0
    %465 = vmatpush1.msra.mxu0 0.0
    %466 = vmatprep.subr.mxu0 0.0
    %467 = vmatpush1.msra.mxu0 0.0
    %468 = vmatprep.subr.mxu0 0.0
    %469 = vmatpush1.msra.mxu0 0.0
    %470 = vmatprep.subr.mxu0 0.0
    %471 = vmatpush1.msra.mxu0 0.0
    %472 = vmatprep.subr.mxu0 0.0
    %473 = vmatpush1.msra.mxu0 0.0
    %474 = vmatprep.subr.mxu0 0.0
    %475 = vmatpush1.msra.mxu0 0.0
    %476 = vmatprep.subr.mxu0 0.0
    %477 = vmatpush1.msra.mxu0 0.0
    %478 = vmatprep.subr.mxu0 0.0
    %479 = vmatpush1.msra.mxu0 0.0
    %480 = vmatprep.subr.mxu0 0.0
    %481 = vmatpush1.msra.mxu0 0.0
    %482 = vmatprep.subr.mxu0 0.0
    %483 = vmatpush1.msra.mxu0 0.0
    %484 = vmatprep.subr.mxu0 0.0
    %485 = vmatpush1.msra.mxu0 0.0
    %486 = vmatprep.mubr.f32.mxu0 0.0
    %487 = vmatmul.mubr.f32.gmra.mrb[0].mxu0 %v210
    %v488 = vpop.f32.mrb[0].mxu0
    %v489 = vadd.f32 0.0, %v488
    %v490 = vpop.f32.mrb[0].mxu0
    %491 = vdwg.mxu0
    %v492 = vld [vmem:[#allocation2] sm:$0xff]
    %v493 = vadd.f32 %v492, %v279
    %494 = vst [vmem:[#allocation2] sm:$0xff] %v493
    %s495 = scalar_lea.vmem [#allocation2], 8
    %v496 = vld [vmem:[%s495] sm:$0xff]
    %v497 = vadd.f32 %v496, %v349
    %498 = vst [vmem:[%s495] sm:$0xff] %v497
    %s499 = scalar_lea.vmem [#allocation2], 16
    %v500 = vld [vmem:[%s499] sm:$0xff]
    %v501 = vadd.f32 %v500, %v419
    %502 = vst [vmem:[%s499] sm:$0xff] %v501
    %s503 = scalar_lea.vmem [#allocation2], 24
    %v504 = vld [vmem:[%s503] sm:$0xff]
    %v505 = vadd.f32 %v504, %v489
    %506 = vst [vmem:[%s503] sm:$0xff] %v505
    // Predicated region
    $region22: #{tpu_custom_call.1} parent=1 // pred_check
      %p507 = pneg %p60
    $region23: #{tpu_custom_call.1} parent=1 // pred_check_branch
      %509 = sbr.rel (%p507) target = $region25
    $region24: #{tpu_custom_call.1} parent=1 // pred_region
      %v510 = vld [vmem:[#allocation2] sm:$0xff]
      %v511 = vld [vmem:[#allocation2 + $0x8] sm:$0xff]
      %v512 = vld [vmem:[#allocation2 + $0x10] sm:$0xff]
      %v513 = vld [vmem:[#allocation2 + $0x18] sm:$0xff]
      %514 = vst [vmem:[#allocation8] sm:$0xff] %v510
      %515 = vst [vmem:[#allocation8 + $0x8] sm:$0xff] %v511
      %516 = vst [vmem:[#allocation8 + $0x10] sm:$0xff] %v512
      %517 = vst [vmem:[#allocation8 + $0x18] sm:$0xff] %v513
    $region25: #{tpu_custom_call.1} parent=1 // pred_fallthru
      _
    // Predicated region
    $region26: #{tpu_custom_call.1} parent=1 // pred_check
      _
    $region27: #{tpu_custom_call.1} parent=1 // pred_check_branch
      %519 = sbr.rel (0) target = $region29
    $region28: #{tpu_custom_call.1} parent=1 // pred_region
      %s521 = ssub.s32 512, 512
      %522 = vsyncadd [#allocation5], %s521
      %s523 = sshll.u32 [#allocation8], 4
      %s524 = int_to_ptr.vmem [resolvable:$true] %s523
      %529 = dma.vmem_to_hbm [thread:$0]  %s524, 512, %s2, [#allocation5], 128, 128, 8
    $region29: #{tpu_custom_call.1} parent=1 // pred_fallthru
      _
    // Predicated region
    $region30: #{tpu_custom_call.1} parent=1 // pred_check
      _
    $region31: #{tpu_custom_call.1} parent=1 // pred_check_branch
      %531 = sbr.rel (0) target = $region33
    $region32: #{tpu_custom_call.1} parent=1 // pred_region
      %532 = dma.done [#allocation5], 512
    $region33: #{tpu_custom_call.1} parent=1 // pred_fallthru
      _
    %533 = vsyncpa [#allocation4], 1
    %534 = vsyncpa [#allocation7], 1
    %535 = vsyncpa [#allocation5], 1

</llo_original>
